<compile_context>
chip_gen: v5e
topology: v5e:2x2
jax: 0.10.0
libtpu: 0.0.40
codegen_flags: <defaults>
</compile_context>

<pallas_src>
import functools

import jax
import jax.numpy as jnp
from jax.experimental import pallas as pl
from jax.experimental.pallas import tpu as pltpu

EPS = 1e-12  # matches the PyTorch module's tfeps


def _fused_layernorm(h, gamma, beta, inv_w):
    """Single-pass LayerNorm over the last axis; real width = 1/inv_w."""
    mu = jnp.sum(h, axis=-1, keepdims=True) * inv_w
    ex2 = jnp.sum(h * h, axis=-1, keepdims=True) * inv_w
    var = jnp.maximum(ex2 - mu * mu, 0.0)
    scale = gamma * jax.lax.rsqrt(var + EPS)          # gamma folded into the scale
    return h * scale + (beta - mu * scale)


def residual_stack_kernel(x_ref, w1_ref, w2_ref, vec_ref, o_ref, *, inv_w):
    # Layer 0: seed the residual carry (resident output block) with the input tile.
    @pl.when(pl.program_id(1) == 0)
    def _():
        o_ref[...] = x_ref[...]

    inp = o_ref[...]                          # (TN, Wp) f32 residual carry

    vec = vec_ref[...]                        # (8, Wp) f32 packed per-layer vectors
    b1, g1, be1 = vec[0:1], vec[1:2], vec[2:3]
    b2, g2, be2 = vec[3:4], vec[4:5], vec[5:6]

    # linear_1: bf16 operands on the MXU, f32 accumulation.
    h = jnp.dot(inp.astype(jnp.bfloat16), w1_ref[...],
                preferred_element_type=jnp.float32) + b1
    # layer_norms_1 (fused) + transfer_functions_1 (ReLU)
    h = _fused_layernorm(h, g1, be1, inv_w)
    h = jnp.maximum(h, 0.0)

    # linear_2
    h = jnp.dot(h.astype(jnp.bfloat16), w2_ref[...],
                preferred_element_type=jnp.float32) + b2
    # layer_norms_2 (fused)
    h = _fused_layernorm(h, g2, be2, inv_w)

    # dropout (eval mode -> identity), then residual add; carry stays f32.
    o_ref[...] = h + inp


def _round_up(x, m):
    return (x + m - 1) // m * m


def _vmem_limit_bytes():
    try:
        cap = getattr(pltpu.get_tpu_info(), "vmem_capacity_bytes", None)
        if cap:
            return int(cap * 0.85)      # leave headroom (v7x: 64 MiB, v5e/v6e: 128 MiB)
    except Exception:
        pass
    return 48 * 1024 * 1024             # conservative: fits every generation


def residual_layer_forward(x_flat, params):
    """x_flat: (N, W) float32.  params: dict of stacked per-layer tensors (unpadded)."""
    N, W = x_flat.shape
    L = params["w1"].shape[0]

    Wp = _round_up(W, 128)              # lane-dense feature axis
    Np = _round_up(N, 8)

    # Row tile: a single tile when small, otherwise 512-row tiles (MXU-filling,
    # bounded VMEM, and >=2 tiles gives megacore a parallel axis to shard).
    if Np <= 1024:
        TN = Np
    else:
        TN = 512
        Np = _round_up(Np, TN)
    n_tiles = Np // TN

    # ---- pad + repack parameters ----
    def pad_mat(w):                     # (L, W, W) -> (L, Wp, Wp), bf16
        return jnp.pad(w, ((0, 0), (0, Wp - W), (0, Wp - W))).astype(jnp.bfloat16)

    def pad_vec(v):                     # (L, W) -> (L, Wp), f32
        return jnp.pad(v, ((0, 0), (0, Wp - W))).astype(jnp.float32)

    w1 = pad_mat(params["w1"])
    w2 = pad_mat(params["w2"])
    zeros = jnp.zeros((L, Wp), jnp.float32)
    vecs = jnp.stack(
        [pad_vec(params["b1"]), pad_vec(params["g1"]), pad_vec(params["be1"]),
         pad_vec(params["b2"]), pad_vec(params["g2"]), pad_vec(params["be2"]),
         zeros, zeros],
        axis=1)                         # (L, 8, Wp)

    xp = jnp.pad(x_flat.astype(jnp.float32), ((0, Np - N), (0, Wp - W)))

    kernel = functools.partial(residual_stack_kernel, inv_w=1.0 / W)

    out = pl.pallas_call(
        kernel,
        out_shape=jax.ShapeDtypeStruct((Np, Wp), jnp.float32),
        grid_spec=pltpu.PrefetchScalarGridSpec(
            num_scalar_prefetch=0,
            grid=(n_tiles, L),                                         # rows x layers
            in_specs=[
                pl.BlockSpec((TN, Wp), lambda i, l: (i, 0)),           # x tile (resident over l)
                pl.BlockSpec((None, Wp, Wp), lambda i, l: (l, 0, 0)),  # w1[l] (bf16)
                pl.BlockSpec((None, Wp, Wp), lambda i, l: (l, 0, 0)),  # w2[l] (bf16)
                pl.BlockSpec((None, 8, Wp), lambda i, l: (l, 0, 0)),   # packed vectors[l]
            ],
            out_specs=pl.BlockSpec((TN, Wp), lambda i, l: (i, 0)),     # residual carry
        ),
        compiler_params=pltpu.CompilerParams(
            dimension_semantics=("parallel", "arbitrary"),
            vmem_limit_bytes=_vmem_limit_bytes(),
        ),
    )(xp, w1, w2, vecs)

    return out[:N, :W]


def reference_forward(x_flat, params, *, mimic_kernel_numerics):
    """Pure-JAX reference of the PyTorch forward (eval mode).

    mimic_kernel_numerics=True reproduces the kernel's deliberate numeric
    choices (bf16 matmul operands with f32 accumulation, fused LayerNorm) so a
    tight tolerance can be used; False is the plain f32 / two-pass form.
    """
    L = params["w1"].shape[0]

    def dot(a, w):
        if mimic_kernel_numerics:
            return jnp.dot(a.astype(jnp.bfloat16), w.astype(jnp.bfloat16),
                           preferred_element_type=jnp.float32)
        return jnp.dot(a, w, preferred_element_type=jnp.float32)

    def layernorm(h, g, b):
        mu = jnp.mean(h, axis=-1, keepdims=True)
        if mimic_kernel_numerics:
            var = jnp.maximum(jnp.mean(h * h, axis=-1, keepdims=True) - mu * mu, 0.0)
            scale = g * jax.lax.rsqrt(var + EPS)
            return h * scale + (b - mu * scale)
        var = jnp.mean((h - mu) ** 2, axis=-1, keepdims=True)
        return (h - mu) / jnp.sqrt(var + EPS) * g + b

    y = x_flat
    for l in range(L):
        inp = y
        h = dot(y, params["w1"][l]) + params["b1"][l]
        h = layernorm(h, params["g1"][l], params["be1"][l])
        h = jnp.maximum(h, 0.0)
        h = dot(h, params["w2"][l]) + params["b2"][l]
        h = layernorm(h, params["g2"][l], params["be2"][l])
        y = h + inp
    return y


def init_params(key, num_layers, width):
    """Deterministic synthetic parameters.  Linear weights stored as (in, out)."""
    ks = jax.random.split(key, 6)
    scale = 1.0 / jnp.sqrt(width)
    return {
        "w1": jax.random.uniform(ks[0], (num_layers, width, width),
                                 jnp.float32, -scale, scale),
        "b1": jax.random.uniform(ks[1], (num_layers, width),
                                 jnp.float32, -scale, scale),
        "g1": jnp.ones((num_layers, width), jnp.float32),
        "be1": jnp.zeros((num_layers, width), jnp.float32),
        "w2": jax.random.uniform(ks[2], (num_layers, width, width),
                                 jnp.float32, -scale, scale),
        "b2": jax.random.uniform(ks[3], (num_layers, width),
                                 jnp.float32, -scale, scale),
        "g2": jnp.ones((num_layers, width), jnp.float32),
        "be2": jnp.zeros((num_layers, width), jnp.float32),
    }


if __name__ == "__main__":
    num_layers = 3
    width = 32
    batch, seq = 2, 8           # x: (batch, seq, width) like a typical Linear input

    key = jax.random.PRNGKey(0)
    kx, kp = jax.random.split(key)
    x = jax.random.normal(kx, (batch, seq, width), jnp.float32)
    params = init_params(kp, num_layers, width)

    x_flat = x.reshape(batch * seq, width)
    out_flat = residual_layer_forward(x_flat, params)
    out = out_flat.reshape(batch, seq, width)
    jax.block_until_ready(out)

    # Tight check: pure-JAX reference with the kernel's numeric choices.
    ref_tight = reference_forward(x_flat, params, mimic_kernel_numerics=True)
    assert jnp.allclose(out_flat, ref_tight, atol=5e-3, rtol=5e-3), \
        "mismatch vs numerics-matched JAX reference"

    # Sanity check: plain f32 / two-pass-LayerNorm reference (PyTorch semantics);
    # loose tolerance covers the deliberate bf16 matmul-operand rounding.
    ref_f32 = reference_forward(x_flat, params, mimic_kernel_numerics=False)
    assert jnp.allclose(out_flat, ref_f32, atol=1e-1, rtol=1e-1), \
        "mismatch vs f32 JAX reference"

    print("KERNEL_OK")
</pallas_src>

<mosaic_0001>
module attributes {stable_mosaic.version = 11 : i64} {
  func.func @residual_stack_kernel(%arg0: i32, %arg1: i32, %arg2: memref<16x128xf32, #tpu.memory_space<vmem>>, %arg3: memref<1x128x128xbf16, #tpu.memory_space<vmem>>, %arg4: memref<1x128x128xbf16, #tpu.memory_space<vmem>>, %arg5: memref<1x8x128xf32, #tpu.memory_space<vmem>>, %arg6: memref<16x128xf32, #tpu.memory_space<vmem>>) attributes {dimension_semantics = [#tpu.dimension_semantics<parallel>, #tpu.dimension_semantics<arbitrary>], iteration_bounds = array<i64: 1, 3>, scalar_prefetch = 0 : i64, scratch_operands = 0 : i64, tpu.core_type = #tpu.core_type<tc>, window_params = [{transform_indices = @transform_0, window_bounds = array<i64: 16, 128>}, {transform_indices = @transform_1, window_bounds = array<i64: 1, 128, 128>}, {transform_indices = @transform_2, window_bounds = array<i64: 1, 128, 128>}, {transform_indices = @transform_3, window_bounds = array<i64: 1, 8, 128>}, {transform_indices = @transform_4, window_bounds = array<i64: 16, 128>}]} {
    %c0_i32 = arith.constant 0 : i32
    %0 = arith.cmpi eq, %arg1, %c0_i32 : i32
    %1 = arith.extui %0 : i1 to i32
    %c0_i32_0 = arith.constant 0 : i32
    %2 = arith.cmpi ne, %1, %c0_i32_0 : i32
    scf.if %2 {
      %c0_27 = arith.constant 0 : index
      %c0_28 = arith.constant 0 : index
      %78 = vector.load %arg2[%c0_27, %c0_28] : memref<16x128xf32, #tpu.memory_space<vmem>>, vector<16x128xf32>
      %c0_29 = arith.constant 0 : index
      %c0_30 = arith.constant 0 : index
      %79 = vector.load %arg6[%c0_29, %c0_30] : memref<16x128xf32, #tpu.memory_space<vmem>>, vector<16x128xf32>
      tpu.vector_store %arg6[%c0_29, %c0_30], %78 {strides = array<i32>} : memref<16x128xf32, #tpu.memory_space<vmem>>, vector<16x128xf32>,
    } else {
    }
    %c0 = arith.constant 0 : index
    %c0_1 = arith.constant 0 : index
    %3 = vector.load %arg6[%c0, %c0_1] : memref<16x128xf32, #tpu.memory_space<vmem>>, vector<16x128xf32>
    %c0_2 = arith.constant 0 : index
    %c0_3 = arith.constant 0 : index
    %c0_4 = arith.constant 0 : index
    %4 = vector.load %arg5[%c0_2, %c0_3, %c0_4] : memref<1x8x128xf32, #tpu.memory_space<vmem>>, vector<1x8x128xf32>
    %5 = vector.shape_cast %4 : vector<1x8x128xf32> to vector<8x128xf32>
    %6 = vector.extract_strided_slice %5 {offsets = [0, 0], sizes = [1, 128], strides = [1, 1]} : vector<8x128xf32> to vector<1x128xf32>
    %7 = vector.extract_strided_slice %5 {offsets = [1, 0], sizes = [1, 128], strides = [1, 1]} : vector<8x128xf32> to vector<1x128xf32>
    %8 = vector.extract_strided_slice %5 {offsets = [2, 0], sizes = [1, 128], strides = [1, 1]} : vector<8x128xf32> to vector<1x128xf32>
    %9 = vector.extract_strided_slice %5 {offsets = [3, 0], sizes = [1, 128], strides = [1, 1]} : vector<8x128xf32> to vector<1x128xf32>
    %10 = vector.extract_strided_slice %5 {offsets = [4, 0], sizes = [1, 128], strides = [1, 1]} : vector<8x128xf32> to vector<1x128xf32>
    %11 = vector.extract_strided_slice %5 {offsets = [5, 0], sizes = [1, 128], strides = [1, 1]} : vector<8x128xf32> to vector<1x128xf32>
    %12 = arith.truncf %3 : vector<16x128xf32> to vector<16x128xbf16>
    %c0_5 = arith.constant 0 : index
    %c0_6 = arith.constant 0 : index
    %c0_7 = arith.constant 0 : index
    %13 = vector.load %arg3[%c0_5, %c0_6, %c0_7] : memref<1x128x128xbf16, #tpu.memory_space<vmem>>, vector<1x128x128xbf16>
    %14 = vector.shape_cast %13 : vector<1x128x128xbf16> to vector<128x128xbf16>
    %cst = arith.constant dense<0.000000e+00> : vector<16x128xf32>
    %15 = tpu.matmul %12, %14, %cst {dimension_numbers = #tpu.dot_dimension_numbers<[1], [0], [0], [1], [0, 0, 1, 1], [], []>} : vector<16x128xbf16>, vector<128x128xbf16>, vector<16x128xf32> -> vector<16x128xf32>
    %16 = vector.broadcast %6 : vector<1x128xf32> to vector<16x128xf32>
    %17 = arith.addf %15, %16 : vector<16x128xf32>
    %cst_8 = arith.constant dense<0.000000e+00> : vector<16xf32>
    %18 = vector.multi_reduction <add>, %17, %cst_8 [1] : vector<16x128xf32> to vector<16xf32>
    %19 = vector.shape_cast %18 : vector<16xf32> to vector<16x1xf32>
    %cst_9 = arith.constant 3.125000e-02 : f32
    %20 = vector.broadcast %cst_9 : f32 to vector<16x1xf32>
    %21 = arith.mulf %19, %20 : vector<16x1xf32>
    %22 = arith.mulf %17, %17 : vector<16x128xf32>
    %cst_10 = arith.constant dense<0.000000e+00> : vector<16xf32>
    %23 = vector.multi_reduction <add>, %22, %cst_10 [1] : vector<16x128xf32> to vector<16xf32>
    %24 = vector.shape_cast %23 : vector<16xf32> to vector<16x1xf32>
    %cst_11 = arith.constant 3.125000e-02 : f32
    %25 = vector.broadcast %cst_11 : f32 to vector<16x1xf32>
    %26 = arith.mulf %24, %25 : vector<16x1xf32>
    %27 = arith.mulf %21, %21 : vector<16x1xf32>
    %28 = arith.subf %26, %27 : vector<16x1xf32>
    %cst_12 = arith.constant 0.000000e+00 : f32
    %29 = vector.broadcast %cst_12 : f32 to vector<16x1xf32>
    %30 = arith.maximumf %28, %29 : vector<16x1xf32>
    %cst_13 = arith.constant 9.99999996E-13 : f32
    %31 = vector.broadcast %cst_13 : f32 to vector<16x1xf32>
    %32 = arith.addf %30, %31 : vector<16x1xf32>
    %33 = math.rsqrt %32 : vector<16x1xf32>
    %34 = vector.broadcast %7 : vector<1x128xf32> to vector<16x128xf32>
    %35 = vector.broadcast %33 : vector<16x1xf32> to vector<16x128xf32>
    %36 = arith.mulf %34, %35 : vector<16x128xf32>
    %37 = arith.mulf %17, %36 : vector<16x128xf32>
    %38 = vector.broadcast %21 : vector<16x1xf32> to vector<16x128xf32>
    %39 = arith.mulf %38, %36 : vector<16x128xf32>
    %40 = vector.broadcast %8 : vector<1x128xf32> to vector<16x128xf32>
    %41 = arith.subf %40, %39 : vector<16x128xf32>
    %42 = arith.addf %37, %41 : vector<16x128xf32>
    %cst_14 = arith.constant 0.000000e+00 : f32
    %43 = vector.broadcast %cst_14 : f32 to vector<16x128xf32>
    %44 = arith.maximumf %42, %43 : vector<16x128xf32>
    %45 = arith.truncf %44 : vector<16x128xf32> to vector<16x128xbf16>
    %c0_15 = arith.constant 0 : index
    %c0_16 = arith.constant 0 : index
    %c0_17 = arith.constant 0 : index
    %46 = vector.load %arg4[%c0_15, %c0_16, %c0_17] : memref<1x128x128xbf16, #tpu.memory_space<vmem>>, vector<1x128x128xbf16>
    %47 = vector.shape_cast %46 : vector<1x128x128xbf16> to vector<128x128xbf16>
    %cst_18 = arith.constant dense<0.000000e+00> : vector<16x128xf32>
    %48 = tpu.matmul %45, %47, %cst_18 {dimension_numbers = #tpu.dot_dimension_numbers<[1], [0], [0], [1], [0, 0, 1, 1], [], []>} : vector<16x128xbf16>, vector<128x128xbf16>, vector<16x128xf32> -> vector<16x128xf32>
    %49 = vector.broadcast %9 : vector<1x128xf32> to vector<16x128xf32>
    %50 = arith.addf %48, %49 : vector<16x128xf32>
    %cst_19 = arith.constant dense<0.000000e+00> : vector<16xf32>
    %51 = vector.multi_reduction <add>, %50, %cst_19 [1] : vector<16x128xf32> to vector<16xf32>
    %52 = vector.shape_cast %51 : vector<16xf32> to vector<16x1xf32>
    %cst_20 = arith.constant 3.125000e-02 : f32
    %53 = vector.broadcast %cst_20 : f32 to vector<16x1xf32>
    %54 = arith.mulf %52, %53 : vector<16x1xf32>
    %55 = arith.mulf %50, %50 : vector<16x128xf32>
    %cst_21 = arith.constant dense<0.000000e+00> : vector<16xf32>
    %56 = vector.multi_reduction <add>, %55, %cst_21 [1] : vector<16x128xf32> to vector<16xf32>
    %57 = vector.shape_cast %56 : vector<16xf32> to vector<16x1xf32>
    %cst_22 = arith.constant 3.125000e-02 : f32
    %58 = vector.broadcast %cst_22 : f32 to vector<16x1xf32>
    %59 = arith.mulf %57, %58 : vector<16x1xf32>
    %60 = arith.mulf %54, %54 : vector<16x1xf32>
    %61 = arith.subf %59, %60 : vector<16x1xf32>
    %cst_23 = arith.constant 0.000000e+00 : f32
    %62 = vector.broadcast %cst_23 : f32 to vector<16x1xf32>
    %63 = arith.maximumf %61, %62 : vector<16x1xf32>
    %cst_24 = arith.constant 9.99999996E-13 : f32
    %64 = vector.broadcast %cst_24 : f32 to vector<16x1xf32>
    %65 = arith.addf %63, %64 : vector<16x1xf32>
    %66 = math.rsqrt %65 : vector<16x1xf32>
    %67 = vector.broadcast %10 : vector<1x128xf32> to vector<16x128xf32>
    %68 = vector.broadcast %66 : vector<16x1xf32> to vector<16x128xf32>
    %69 = arith.mulf %67, %68 : vector<16x128xf32>
    %70 = arith.mulf %50, %69 : vector<16x128xf32>
    %71 = vector.broadcast %54 : vector<16x1xf32> to vector<16x128xf32>
    %72 = arith.mulf %71, %69 : vector<16x128xf32>
    %73 = vector.broadcast %11 : vector<1x128xf32> to vector<16x128xf32>
    %74 = arith.subf %73, %72 : vector<16x128xf32>
    %75 = arith.addf %70, %74 : vector<16x128xf32>
    %76 = arith.addf %75, %3 : vector<16x128xf32>
    %c0_25 = arith.constant 0 : index
    %c0_26 = arith.constant 0 : index
    %77 = vector.load %arg6[%c0_25, %c0_26] : memref<16x128xf32, #tpu.memory_space<vmem>>, vector<16x128xf32>
    tpu.vector_store %arg6[%c0_25, %c0_26], %76 {strides = array<i32>} : memref<16x128xf32, #tpu.memory_space<vmem>>, vector<16x128xf32>,
    return
  }
  func.func @transform_0(%arg0: i32, %arg1: i32) -> (i32, i32) {
    %c0_i32 = arith.constant 0 : i32
    %c0_i32_0 = arith.constant 0 : i32
    return %arg0, %c0_i32 : i32, i32
  }
  func.func @transform_1(%arg0: i32, %arg1: i32) -> (i32, i32, i32) {
    %c0_i32 = arith.constant 0 : i32
    %c0_i32_0 = arith.constant 0 : i32
    %c0_i32_1 = arith.constant 0 : i32
    return %arg1, %c0_i32, %c0_i32_0 : i32, i32, i32
  }
  func.func @transform_2(%arg0: i32, %arg1: i32) -> (i32, i32, i32) {
    %c0_i32 = arith.constant 0 : i32
    %c0_i32_0 = arith.constant 0 : i32
    %c0_i32_1 = arith.constant 0 : i32
    return %arg1, %c0_i32, %c0_i32_0 : i32, i32, i32
  }
  func.func @transform_3(%arg0: i32, %arg1: i32) -> (i32, i32, i32) {
    %c0_i32 = arith.constant 0 : i32
    %c0_i32_0 = arith.constant 0 : i32
    %c0_i32_1 = arith.constant 0 : i32
    return %arg1, %c0_i32, %c0_i32_0 : i32, i32, i32
  }
  func.func @transform_4(%arg0: i32, %arg1: i32) -> (i32, i32) {
    %c0_i32 = arith.constant 0 : i32
    %c0_i32_0 = arith.constant 0 : i32
    return %arg0, %c0_i32 : i32, i32
  }
}

</mosaic_0001>

<llo_original>
// kernel: tpu_custom_call.1
$region0: #{tpu_custom_call.1}
  #allocation0 [shape = 'u32[]', space=smem, size = 0x4, offset = 0x4, fixed_abs, tag = 'smem constant byte address 0x4 - core index']
  #allocation1 [shape = 'u32[72,128]{1,0:T(1,128)}', space=vmem, size = 0x9000, scoped, tag = 'internal scratch']
  %s0 = inlined_call_operand.hbm [shape: f32[16,128], index: 0, kind: input, shape index: {}]
  %s1 = inlined_call_operand.hbm [shape: bf16[3,128,128], index: 1, kind: input, shape index: {}]
  %s2 = inlined_call_operand.hbm [shape: bf16[3,128,128], index: 2, kind: input, shape index: {}]
  %s3 = inlined_call_operand.hbm [shape: f32[3,8,128], index: 3, kind: input, shape index: {}]
  %s4 = inlined_call_operand.hbm [shape: f32[16,128], index: 4, kind: output, shape index: {}]
  %s5 = sld [smem:[#allocation0]]
  $region69: #{tpu_custom_call.1} parent=0
    _
  %s7 = ssub.s32 1, %s5
  %s8 = scalar_select 0, %s7, %s5
  $region1: #{tpu_custom_call.1} parent=0
    #allocation2 [shape = 'u8[8192]{0}', space=vmem, size = 0x2000, scoped, tag = 'input window, operand 0, single buffered']
    #allocation3 [shape = 's32[2]{0}', space=sflag, size = 0x8, scoped, tag = 'scoped memory for tpu_custom_call.1']
    #allocation4 [shape = 's32[2]{0}', space=sflag, size = 0x8, scoped, tag = 'scoped memory for tpu_custom_call.1']
    #allocation5 [shape = 'u8[65536]{0}', space=vmem, size = 0x10000, scoped, tag = 'input window, operand 1']
    #allocation6 [shape = 's32[2]{0}', space=sflag, size = 0x8, scoped, tag = 'scoped memory for tpu_custom_call.1']
    #allocation7 [shape = 'u8[65536]{0}', space=vmem, size = 0x10000, scoped, tag = 'input window, operand 2']
    #allocation8 [shape = 'u8[8192]{0}', space=vmem, size = 0x2000, scoped, tag = 'input window, operand 3']
    #allocation9 [shape = 's32[2]{0}', space=sflag, size = 0x8, scoped, tag = 'scoped memory for tpu_custom_call.1']
    #allocation10 [shape = 'u8[8192]{0}', space=vmem, size = 0x2000, scoped, tag = 'output window, operand 0, single buffered']
    %9 = vsyncpa [#allocation3], 0
    %10 = vsyncpa [#allocation6], 0
    %s11 = scalar_lea.sflag [#allocation6], 1
    %12 = vsyncpa %s11, 0
    %13 = vsyncpa [#allocation9], 0
    %s14 = scalar_lea.sflag [#allocation9], 1
    %15 = vsyncpa %s14, 0
    %16 = vsyncpa [#allocation4], 0
    loop: start=0, step=1, limit=5
    $region2: #{tpu_custom_call.1} parent=1 // loop_pre_header
      _
    $region3: #{tpu_custom_call.1} parent=1 // loop_header
      %s18 = sphi 0, %s22
      %p19 = scmp.ge.s32.totalorder %s18, 5
      %s25 = sphi 0, %s37
      %s26 = sphi 0, %s33
      %s27 = sphi 0, %s25
      %s28 = sphi 0, %s26
      %s29 = sphi 0, %s27
      %s30 = sphi 0, %s28
      %s40 = sphi 0, %s42
      %s43 = sphi 0, %s40
      %s44 = sphi 0, %s43
      %s60 = sphi 0, %s44
      %s66 = sphi 0, %s68
      %s69 = sphi 0, %s66
      %s70 = sphi 0, %s69
      %s86 = sphi 0, %s70
      %s92 = sphi 0, %s94
      %s95 = sphi 0, %s92
      %s96 = sphi 0, %s95
      %s112 = sphi 0, %s96
      %s118 = sphi 0, %s120
      %s121 = sphi 0, %s118
      %s122 = sphi 0, %s121
      %s138 = sphi 0, %s122
      %s144 = sphi 0, %s146
      %s147 = sphi 0, %s144
      %s148 = sphi 0, %s147
      %s164 = sphi 0, %s148
    $region4: #{tpu_custom_call.1} parent=1 // loop_header_branch
      %21 = sbr.rel (%p19) target = $region8
    $region5: #{tpu_custom_call.1} parent=1 // loop_body
      %s23 = ssub.s32 %s18, 1
      %s24 = ssub.s32 %s18, 2
      %s31 = sadd.s32 1, %s26
      %p32 = scmp.ge.s32.totalorder %s31, 3
      %s33 = scalar_select %p32, 0, %s31
      %s34 = sadd.s32 1, %s25
      %s35 = scalar_select %p32, %s34, %s25
      %p36 = scmp.ge.s32.totalorder %s35, 1
      %s37 = scalar_select %p36, 0, %s35
      %s38 = ssub.s32 %s25, %s37
      %p39 = scmp.eq.s32.totalorder %s38, 0
      %s41 = sadd.s32 %s40, 1
      %s42 = scalar_select %p39, %s40, %s41
      %p45 = pneg %p39
      %p46 = scmp.eq.s32.totalorder %s18, 2
      %p47 = por %p45, %p46
      %p48 = scmp.ne.s32.totalorder %s40, %s43
      %p49 = scmp.eq.s32.totalorder %s18, 0
      %p50 = por %p48, %p49
      %p51 = scmp.ne.s32.totalorder %s40, %s43
      %p52 = scmp.eq.s32.totalorder %s23, 2
      %p53 = por %p51, %p52
      %p54 = scmp.ne.s32.totalorder %s43, %s44
      %p55 = scmp.eq.s32.totalorder %s23, 0
      %p56 = por %p54, %p55
      %p57 = scmp.ne.s32.totalorder %s43, %s44
      %p58 = scmp.eq.s32.totalorder %s24, 2
      %p59 = por %p57, %p58
      %p61 = scmp.ne.s32.totalorder %s44, %s60
      %p62 = scmp.eq.s32.totalorder %s24, 0
      %p63 = por %p61, %p62
      %s64 = ssub.s32 %s26, %s33
      %p65 = scmp.eq.s32.totalorder %s64, 0
      %s67 = sadd.s32 %s66, 1
      %s68 = scalar_select %p65, %s66, %s67
      %p71 = pneg %p65
      %p72 = scmp.eq.s32.totalorder %s18, 2
      %p73 = por %p71, %p72
      %p74 = scmp.ne.s32.totalorder %s66, %s69
      %p75 = scmp.eq.s32.totalorder %s18, 0
      %p76 = por %p74, %p75
      %p77 = scmp.ne.s32.totalorder %s66, %s69
      %p78 = scmp.eq.s32.totalorder %s23, 2
      %p79 = por %p77, %p78
      %p80 = scmp.ne.s32.totalorder %s69, %s70
      %p81 = scmp.eq.s32.totalorder %s23, 0
      %p82 = por %p80, %p81
      %p83 = scmp.ne.s32.totalorder %s69, %s70
      %p84 = scmp.eq.s32.totalorder %s24, 2
      %p85 = por %p83, %p84
      %p87 = scmp.ne.s32.totalorder %s70, %s86
      %p88 = scmp.eq.s32.totalorder %s24, 0
      %p89 = por %p87, %p88
      %s90 = ssub.s32 %s26, %s33
      %p91 = scmp.eq.s32.totalorder %s90, 0
      %s93 = sadd.s32 %s92, 1
      %s94 = scalar_select %p91, %s92, %s93
      %p97 = pneg %p91
      %p98 = scmp.eq.s32.totalorder %s18, 2
      %p99 = por %p97, %p98
      %p100 = scmp.ne.s32.totalorder %s92, %s95
      %p101 = scmp.eq.s32.totalorder %s18, 0
      %p102 = por %p100, %p101
      %p103 = scmp.ne.s32.totalorder %s92, %s95
      %p104 = scmp.eq.s32.totalorder %s23, 2
      %p105 = por %p103, %p104
      %p106 = scmp.ne.s32.totalorder %s95, %s96
      %p107 = scmp.eq.s32.totalorder %s23, 0
      %p108 = por %p106, %p107
      %p109 = scmp.ne.s32.totalorder %s95, %s96
      %p110 = scmp.eq.s32.totalorder %s24, 2
      %p111 = por %p109, %p110
      %p113 = scmp.ne.s32.totalorder %s96, %s112
      %p114 = scmp.eq.s32.totalorder %s24, 0
      %p115 = por %p113, %p114
      %s116 = ssub.s32 %s26, %s33
      %p117 = scmp.eq.s32.totalorder %s116, 0
      %s119 = sadd.s32 %s118, 1
      %s120 = scalar_select %p117, %s118, %s119
      %p123 = pneg %p117
      %p124 = scmp.eq.s32.totalorder %s18, 2
      %p125 = por %p123, %p124
      %p126 = scmp.ne.s32.totalorder %s118, %s121
      %p127 = scmp.eq.s32.totalorder %s18, 0
      %p128 = por %p126, %p127
      %p129 = scmp.ne.s32.totalorder %s118, %s121
      %p130 = scmp.eq.s32.totalorder %s23, 2
      %p131 = por %p129, %p130
      %p132 = scmp.ne.s32.totalorder %s121, %s122
      %p133 = scmp.eq.s32.totalorder %s23, 0
      %p134 = por %p132, %p133
      %p135 = scmp.ne.s32.totalorder %s121, %s122
      %p136 = scmp.eq.s32.totalorder %s24, 2
      %p137 = por %p135, %p136
      %p139 = scmp.ne.s32.totalorder %s122, %s138
      %p140 = scmp.eq.s32.totalorder %s24, 0
      %p141 = por %p139, %p140
      %s142 = ssub.s32 %s25, %s37
      %p143 = scmp.eq.s32.totalorder %s142, 0
      %s145 = sadd.s32 %s144, 1
      %s146 = scalar_select %p143, %s144, %s145
      %p149 = pneg %p143
      %p150 = scmp.eq.s32.totalorder %s18, 2
      %p151 = por %p149, %p150
      %p152 = scmp.ne.s32.totalorder %s144, %s147
      %p153 = scmp.eq.s32.totalorder %s18, 0
      %p154 = por %p152, %p153
      %p155 = scmp.ne.s32.totalorder %s144, %s147
      %p156 = scmp.eq.s32.totalorder %s23, 2
      %p157 = por %p155, %p156
      %p158 = scmp.ne.s32.totalorder %s147, %s148
      %p159 = scmp.eq.s32.totalorder %s23, 0
      %p160 = por %p158, %p159
      %p161 = scmp.ne.s32.totalorder %s147, %s148
      %p162 = scmp.eq.s32.totalorder %s24, 2
      %p163 = por %p161, %p162
      %p165 = scmp.ne.s32.totalorder %s148, %s164
      %p166 = scmp.eq.s32.totalorder %s24, 0
      %p167 = por %p165, %p166
      %p168 = scmp.le.s32.totalorder 1, %s18
      %p169 = scmp.lt.s32.totalorder %s18, 4
      %p170 = pnand %p168, %p169
      %p171 = pneg %p170
      // Predicated region
      $region9: #{tpu_custom_call.1} parent=5 // pred_check
        _
      $region10: #{tpu_custom_call.1} parent=5 // pred_check_branch
        %173 = sbr.rel (%p170) target = $region12
      $region11: #{tpu_custom_call.1} parent=5 // pred_region
        %s174 = ssub.s32 %s18, 1
        // Predicated region
        $region13: #{tpu_custom_call.1} parent=11 // pred_check
          %p175 = pneg %p56
        $region14: #{tpu_custom_call.1} parent=11 // pred_check_branch
          %177 = sbr.rel (%p175) target = $region16
        $region15: #{tpu_custom_call.1} parent=11 // pred_region
          %s178 = smul.u32 2, %s27
          %180 = vsyncadd [#allocation3], 0
          %s181 = smul.addr %s178, 8
          %s182 = scalar_lea.hbm %s0, %s181
          %s183 = sshll.u32 %s182, 4
          %s184 = int_to_ptr.hbm [resolvable:$true] %s183
          %s185 = sshll.u32 [#allocation2], 4
          %s186 = int_to_ptr.vmem [resolvable:$true] %s185
          %191 = dma.hbm_to_vmem [thread:$0]  %s184, 256, %s186, [#allocation3], 128, 128, 8
        $region16: #{tpu_custom_call.1} parent=11 // pred_fallthru
          _
      $region12: #{tpu_custom_call.1} parent=5 // pred_fallthru
        _
      %p192 = scmp.lt.s32.totalorder %s18, 3
      // Predicated region
      $region17: #{tpu_custom_call.1} parent=5 // pred_check
        %p193 = pneg %p192
      $region18: #{tpu_custom_call.1} parent=5 // pred_check_branch
        %195 = sbr.rel (%p193) target = $region20
      $region19: #{tpu_custom_call.1} parent=5 // pred_region
        // Predicated region
        $region21: #{tpu_custom_call.1} parent=19 // pred_check
          %p196 = pneg %p76
        $region22: #{tpu_custom_call.1} parent=19 // pred_check_branch
          %198 = sbr.rel (%p196) target = $region24
        $region23: #{tpu_custom_call.1} parent=19 // pred_region
          %s199 = sand.u32 %s18, 1
          %s200 = scalar_lea.sflag [#allocation6], %s199
          %s201 = sand.u32 %s66, 1
          %s202 = smul.addr %s201, 64
          %s203 = scalar_lea.vmem [#allocation5], %s202
          %205 = vsyncadd %s200, 0
          %s206 = smul.addr %s26, 16
          %s207 = smul.addr %s206, 4
          %s208 = scalar_lea.hbm %s1, %s207
          %s209 = sshll.u32 %s208, 4
          %s210 = int_to_ptr.hbm [resolvable:$true] %s209
          %s211 = sshll.u32 %s203, 4
          %s212 = int_to_ptr.vmem [resolvable:$true] %s211
          %217 = dma.hbm_to_vmem [thread:$0]  %s210, 1024, %s212, %s200, 64, 64, 4
        $region24: #{tpu_custom_call.1} parent=19 // pred_fallthru
          _
        // Predicated region
        $region25: #{tpu_custom_call.1} parent=19 // pred_check
          %p218 = pneg %p102
        $region26: #{tpu_custom_call.1} parent=19 // pred_check_branch
          %220 = sbr.rel (%p218) target = $region28
        $region27: #{tpu_custom_call.1} parent=19 // pred_region
          %s221 = sand.u32 %s18, 1
          %s222 = scalar_lea.sflag [#allocation6], %s221
          %s223 = sand.u32 %s92, 1
          %s224 = smul.addr %s223, 64
          %s225 = scalar_lea.vmem [#allocation7], %s224
          %227 = vsyncadd %s222, 0
          %s228 = smul.addr %s26, 16
          %s229 = smul.addr %s228, 4
          %s230 = scalar_lea.hbm %s2, %s229
          %s231 = sshll.u32 %s230, 4
          %s232 = int_to_ptr.hbm [resolvable:$true] %s231
          %s233 = sshll.u32 %s225, 4
          %s234 = int_to_ptr.vmem [resolvable:$true] %s233
          %239 = dma.hbm_to_vmem [thread:$0]  %s232, 1024, %s234, %s222, 64, 64, 4
        $region28: #{tpu_custom_call.1} parent=19 // pred_fallthru
          _
        // Predicated region
        $region29: #{tpu_custom_call.1} parent=19 // pred_check
          %p240 = pneg %p128
        $region30: #{tpu_custom_call.1} parent=19 // pred_check_branch
          %242 = sbr.rel (%p240) target = $region32
        $region31: #{tpu_custom_call.1} parent=19 // pred_region
          %s243 = sand.u32 %s118, 1
          %s244 = scalar_lea.sflag [#allocation9], %s243
          %s245 = sand.u32 %s118, 1
          %s246 = smul.addr %s245, 8
          %s247 = scalar_lea.vmem [#allocation8], %s246
          %249 = vsyncadd %s244, 0
          %s250 = smul.addr %s26, 8
          %s251 = scalar_lea.hbm %s3, %s250
          %s253 = sshll.u32 %s251, 4
          %s254 = int_to_ptr.hbm [resolvable:$true] %s253
          %s255 = sshll.u32 %s247, 4
          %s256 = int_to_ptr.vmem [resolvable:$true] %s255
          %258 = dma.hbm_to_vmem [thread:$0]  %s254, 128, %s256, %s244
        $region32: #{tpu_custom_call.1} parent=19 // pred_fallthru
          _
      $region20: #{tpu_custom_call.1} parent=5 // pred_fallthru
        _
      %p259 = scmp.le.s32.totalorder 1, %s18
      %p260 = scmp.lt.s32.totalorder %s18, 4
      %p261 = pnand %p259, %p260
      %p262 = pneg %p261
      // Predicated region
      $region33: #{tpu_custom_call.1} parent=5 // pred_check
        _
      $region34: #{tpu_custom_call.1} parent=5 // pred_check_branch
        %264 = sbr.rel (%p261) target = $region36
      $region35: #{tpu_custom_call.1} parent=5 // pred_region
        %s265 = ssub.s32 %s18, 1
        // Predicated region
        $region37: #{tpu_custom_call.1} parent=35 // pred_check
          %p266 = pneg %p56
        $region38: #{tpu_custom_call.1} parent=35 // pred_check_branch
          %268 = sbr.rel (%p266) target = $region40
        $region39: #{tpu_custom_call.1} parent=35 // pred_region
          %270 = dma.done [#allocation3], 256
        $region40: #{tpu_custom_call.1} parent=35 // pred_fallthru
          _
        %s271 = sand.u32 %s23, 1
        %s272 = scalar_lea.sflag [#allocation6], %s271
        %s273 = sand.u32 %s69, 1
        %s274 = smul.addr %s273, 64
        %s275 = scalar_lea.vmem [#allocation5], %s274
        // Predicated region
        $region41: #{tpu_custom_call.1} parent=35 // pred_check
          %p276 = pneg %p82
        $region42: #{tpu_custom_call.1} parent=35 // pred_check_branch
          %278 = sbr.rel (%p276) target = $region44
        $region43: #{tpu_custom_call.1} parent=35 // pred_region
          %280 = dma.done %s272, 1024
        $region44: #{tpu_custom_call.1} parent=35 // pred_fallthru
          _
        %s281 = sand.u32 %s23, 1
        %s282 = scalar_lea.sflag [#allocation6], %s281
        %s283 = sand.u32 %s95, 1
        %s284 = smul.addr %s283, 64
        %s285 = scalar_lea.vmem [#allocation7], %s284
        // Predicated region
        $region45: #{tpu_custom_call.1} parent=35 // pred_check
          %p286 = pneg %p108
        $region46: #{tpu_custom_call.1} parent=35 // pred_check_branch
          %288 = sbr.rel (%p286) target = $region48
        $region47: #{tpu_custom_call.1} parent=35 // pred_region
          %290 = dma.done %s282, 1024
        $region48: #{tpu_custom_call.1} parent=35 // pred_fallthru
          _
        %s291 = sand.u32 %s121, 1
        %s292 = scalar_lea.sflag [#allocation9], %s291
        %s293 = sand.u32 %s121, 1
        %s294 = smul.addr %s293, 8
        %s295 = scalar_lea.vmem [#allocation8], %s294
        // Predicated region
        $region49: #{tpu_custom_call.1} parent=35 // pred_check
          %p296 = pneg %p134
        $region50: #{tpu_custom_call.1} parent=35 // pred_check_branch
          %298 = sbr.rel (%p296) target = $region52
        $region51: #{tpu_custom_call.1} parent=35 // pred_region
          %300 = dma.done %s292, 128
        $region52: #{tpu_custom_call.1} parent=35 // pred_fallthru
          _
        %p301 = pneg %p56
        %p302 = pneg %p53
        %s303 = sand.u32 %s23, 1
        %s304 = scalar_lea.sflag [#allocation6], %s303
        %s305 = sand.u32 %s69, 1
        %s306 = smul.addr %s305, 64
        %s307 = scalar_lea.vmem [#allocation5], %s306
        %p308 = pneg %p82
        %p309 = pneg %p79
        %s310 = sand.u32 %s23, 1
        %s311 = scalar_lea.sflag [#allocation6], %s310
        %s312 = sand.u32 %s95, 1
        %s313 = smul.addr %s312, 64
        %s314 = scalar_lea.vmem [#allocation7], %s313
        %p315 = pneg %p108
        %p316 = pneg %p105
        %s317 = sand.u32 %s121, 1
        %s318 = scalar_lea.sflag [#allocation9], %s317
        %s319 = sand.u32 %s121, 1
        %s320 = smul.addr %s319, 8
        %s321 = scalar_lea.vmem [#allocation8], %s320
        %p322 = pneg %p134
        %p323 = pneg %p131
        %p324 = pneg %p160
        %p325 = pneg %p157
        %s326 = smul.u32 2, %s27
        %s327 = smul.u32 2, %s27
        %p328 = scmp.eq.s32.totalorder %s28, 0
        // Predicated region
        $region53: #{tpu_custom_call.1} parent=35 // pred_check
          %p329 = pneg %p328
        $region54: #{tpu_custom_call.1} parent=35 // pred_check_branch
          %331 = sbr.rel (%p329) target = $region56
        $region55: #{tpu_custom_call.1} parent=35 // pred_region
          %v332 = vld [vmem:[#allocation2] sm:$0xff]
          %v333 = vld [vmem:[#allocation2 + $0x8] sm:$0xff]
          %334 = vst [vmem:[#allocation10] sm:$0xff] %v332
          %335 = vst [vmem:[#allocation10 + $0x8] sm:$0xff] %v333
        $region56: #{tpu_custom_call.1} parent=35 // pred_fallthru
          _
        %v336 = vld [vmem:[#allocation10] sm:$0xff]
        %v337 = vld [vmem:[#allocation10 + $0x8] sm:$0xff]
        %v338 = vld [vmem:[%s295] sm:$0xff]
        %v339 = vpack.c.bf16 %v337, %v336
        %v340 = vld [vmem:[%s275] sm:$0xf]
        %v341 = vld [vmem:[%s275 + $0x4] sm:$0xf]
        %v342 = vld [vmem:[%s275 + $0x8] sm:$0xf]
        %v343 = vld [vmem:[%s275 + $0xc] sm:$0xf]
        %v344 = vld [vmem:[%s275 + $0x10] sm:$0xf]
        %v345 = vld [vmem:[%s275 + $0x14] sm:$0xf]
        %v346 = vld [vmem:[%s275 + $0x18] sm:$0xf]
        %v347 = vld [vmem:[%s275 + $0x1c] sm:$0xf]
        %v348 = vld [vmem:[%s275 + $0x20] sm:$0xf]
        %v349 = vld [vmem:[%s275 + $0x24] sm:$0xf]
        %v350 = vld [vmem:[%s275 + $0x28] sm:$0xf]
        %v351 = vld [vmem:[%s275 + $0x2c] sm:$0xf]
        %v352 = vld [vmem:[%s275 + $0x30] sm:$0xf]
        %v353 = vld [vmem:[%s275 + $0x34] sm:$0xf]
        %v354 = vld [vmem:[%s275 + $0x38] sm:$0xf]
        %v355 = vld [vmem:[%s275 + $0x3c] sm:$0xf]
        %v356 = vperm.slane %v338, 0
        %v373 = vunpack.c.l.b16 %v340
        %v374 = vunpack.c.l.b16 %v341
        %v375 = vunpack.c.l.b16 %v342
        %v376 = vunpack.c.l.b16 %v343
        %v377 = vunpack.c.l.b16 %v344
        %v378 = vunpack.c.l.b16 %v345
        %v379 = vunpack.c.l.b16 %v346
        %v380 = vunpack.c.l.b16 %v347
        %v381 = vunpack.c.l.b16 %v348
        %v382 = vunpack.c.l.b16 %v349
        %v383 = vunpack.c.l.b16 %v350
        %v384 = vunpack.c.l.b16 %v351
        %v385 = vunpack.c.l.b16 %v352
        %v386 = vunpack.c.l.b16 %v353
        %v387 = vunpack.c.l.b16 %v354
        %v388 = vunpack.c.l.b16 %v355
        %v389 = vpack.c.b16 %v374, %v373
        %v390 = vpack.c.b16 %v376, %v375
        %v391 = vpack.c.b16 %v378, %v377
        %v392 = vpack.c.b16 %v380, %v379
        %v393 = vpack.c.b16 %v382, %v381
        %v394 = vpack.c.b16 %v384, %v383
        %v395 = vpack.c.b16 %v386, %v385
        %v396 = vpack.c.b16 %v388, %v387
        %405 = vmatpush.bf16.msra.mxu0 %v396
        %406 = vmatpush.bf16.msra.mxu0 %v395
        %407 = vmatpush.bf16.msra.mxu0 %v394
        %408 = vmatpush.bf16.msra.mxu0 %v393
        %409 = vmatpush.bf16.msra.mxu0 %v392
        %410 = vmatpush.bf16.msra.mxu0 %v391
        %411 = vmatpush.bf16.msra.mxu0 %v390
        %412 = vmatpush.bf16.msra.mxu0 %v389
        %413 = vmatmul.bf16.gmra.mxu0 %v339
        %v414 = vpop.f32.mrf.mxu0
        %v415 = vadd.f32 %v356, %v414
        %v416 = vpop.f32.mrf.mxu0
        %v417 = vadd.f32 %v356, %v416
        %418 = vdwg.mxu0
        %419 = vadd.xlane.f32.xlu0 %v415
        %v420 = vpop.xlane.xlu0 %419
        %421 = vadd.xlane.f32.xlu0 %v417
        %v422 = vpop.xlane.xlu0 %421
        %v423 = vmul.f32 %v420, 0.03125
        %v424 = vmul.f32 %v422, 0.03125
        %v425 = vmul.f32 %v415, %v415
        %v426 = vmul.f32 %v417, %v417
        %427 = vadd.xlane.f32.xlu0 %v425
        %v428 = vpop.xlane.xlu0 %427
        %429 = vadd.xlane.f32.xlu0 %v426
        %v430 = vpop.xlane.xlu0 %429
        %v431 = vmul.f32 %v428, 0.03125
        %v432 = vmul.f32 %v430, 0.03125
        %v433 = vmul.f32 %v423, %v423
        %v434 = vmul.f32 %v424, %v424
        %v435 = vsub.f32 %v431, %v433
        %v436 = vsub.f32 %v432, %v434
        %v437 = vmax.f32 %v435, 0.0
        %v438 = vmax.f32 %v436, 0.0
        %v439 = vadd.f32 %v437, 1e-12
        %v440 = vadd.f32 %v438, 1e-12
        %v441 = vrsqrt.pop %v439
        %v442 = vmul.f32 %v441, %v439
        %v443 = vmul.f32 %v442, %v441
        %v444 = vmul.f32 0.5, %v443
        %v445 = vsub.f32 1.5, %v444
        %v446 = vmul.f32 %v441, %v445
        %vm447 = vweird.f32 %v439
        %vm448 = vweird.f32 %v441
        %vm449 = vmor %vm447, %vm448
        %v450 = vsel %vm449, %v441, %v446
        %v451 = vrsqrt.pop %v440
        %v452 = vmul.f32 %v451, %v440
        %v453 = vmul.f32 %v452, %v451
        %v454 = vmul.f32 0.5, %v453
        %v455 = vsub.f32 1.5, %v454
        %v456 = vmul.f32 %v451, %v455
        %vm457 = vweird.f32 %v440
        %vm458 = vweird.f32 %v451
        %vm459 = vmor %vm457, %vm458
        %v460 = vsel %vm459, %v451, %v456
        %v461 = vperm.slane %v338, 1
        %v462 = vmul.f32 %v461, %v450
        %v463 = vmul.f32 %v461, %v460
        %v464 = vmul.f32 %v415, %v462
        %v465 = vmul.f32 %v417, %v463
        %v466 = vmul.f32 %v423, %v462
        %v467 = vmul.f32 %v424, %v463
        %v468 = vperm.slane %v338, 2
        %v469 = vsub.f32 %v468, %v466
        %v470 = vsub.f32 %v468, %v467
        %v471 = vadd.f32 %v464, %v469
        %v472 = vadd.f32 %v465, %v470
        %v473 = vmax.f32 %v471, 0.0
        %v474 = vmax.f32 %v472, 0.0
        %v475 = vpack.c.bf16 %v474, %v473
        %v476 = vld [vmem:[%s285] sm:$0xf]
        %v477 = vld [vmem:[%s285 + $0x4] sm:$0xf]
        %v478 = vld [vmem:[%s285 + $0x8] sm:$0xf]
        %v479 = vld [vmem:[%s285 + $0xc] sm:$0xf]
        %v480 = vld [vmem:[%s285 + $0x10] sm:$0xf]
        %v481 = vld [vmem:[%s285 + $0x14] sm:$0xf]
        %v482 = vld [vmem:[%s285 + $0x18] sm:$0xf]
        %v483 = vld [vmem:[%s285 + $0x1c] sm:$0xf]
        %v484 = vld [vmem:[%s285 + $0x20] sm:$0xf]
        %v485 = vld [vmem:[%s285 + $0x24] sm:$0xf]
        %v486 = vld [vmem:[%s285 + $0x28] sm:$0xf]
        %v487 = vld [vmem:[%s285 + $0x2c] sm:$0xf]
        %v488 = vld [vmem:[%s285 + $0x30] sm:$0xf]
        %v489 = vld [vmem:[%s285 + $0x34] sm:$0xf]
        %v490 = vld [vmem:[%s285 + $0x38] sm:$0xf]
        %v491 = vld [vmem:[%s285 + $0x3c] sm:$0xf]
        %v492 = vperm.slane %v338, 3
        %v509 = vunpack.c.l.b16 %v476
        %v510 = vunpack.c.l.b16 %v477
        %v511 = vunpack.c.l.b16 %v478
        %v512 = vunpack.c.l.b16 %v479
        %v513 = vunpack.c.l.b16 %v480
        %v514 = vunpack.c.l.b16 %v481
        %v515 = vunpack.c.l.b16 %v482
        %v516 = vunpack.c.l.b16 %v483
        %v517 = vunpack.c.l.b16 %v484
        %v518 = vunpack.c.l.b16 %v485
        %v519 = vunpack.c.l.b16 %v486
        %v520 = vunpack.c.l.b16 %v487
        %v521 = vunpack.c.l.b16 %v488
        %v522 = vunpack.c.l.b16 %v489
        %v523 = vunpack.c.l.b16 %v490
        %v524 = vunpack.c.l.b16 %v491
        %v525 = vpack.c.b16 %v510, %v509
        %v526 = vpack.c.b16 %v512, %v511
        %v527 = vpack.c.b16 %v514, %v513
        %v528 = vpack.c.b16 %v516, %v515
        %v529 = vpack.c.b16 %v518, %v517
        %v530 = vpack.c.b16 %v520, %v519
        %v531 = vpack.c.b16 %v522, %v521
        %v532 = vpack.c.b16 %v524, %v523
        %541 = vmatpush.bf16.msra.mxu0 %v532
        %542 = vmatpush.bf16.msra.mxu0 %v531
        %543 = vmatpush.bf16.msra.mxu0 %v530
        %544 = vmatpush.bf16.msra.mxu0 %v529
        %545 = vmatpush.bf16.msra.mxu0 %v528
        %546 = vmatpush.bf16.msra.mxu0 %v527
        %547 = vmatpush.bf16.msra.mxu0 %v526
        %548 = vmatpush.bf16.msra.mxu0 %v525
        %549 = vmatmul.bf16.gmra.mxu0 %v475
        %v550 = vpop.f32.mrf.mxu0
        %v551 = vadd.f32 %v492, %v550
        %v552 = vpop.f32.mrf.mxu0
        %v553 = vadd.f32 %v492, %v552
        %554 = vdwg.mxu0
        %555 = vadd.xlane.f32.xlu0 %v551
        %v556 = vpop.xlane.xlu0 %555
        %557 = vadd.xlane.f32.xlu0 %v553
        %v558 = vpop.xlane.xlu0 %557
        %v559 = vmul.f32 %v556, 0.03125
        %v560 = vmul.f32 %v558, 0.03125
        %v561 = vmul.f32 %v551, %v551
        %v562 = vmul.f32 %v553, %v553
        %563 = vadd.xlane.f32.xlu0 %v561
        %v564 = vpop.xlane.xlu0 %563
        %565 = vadd.xlane.f32.xlu0 %v562
        %v566 = vpop.xlane.xlu0 %565
        %v567 = vmul.f32 %v564, 0.03125
        %v568 = vmul.f32 %v566, 0.03125
        %v569 = vmul.f32 %v559, %v559
        %v570 = vmul.f32 %v560, %v560
        %v571 = vsub.f32 %v567, %v569
        %v572 = vsub.f32 %v568, %v570
        %v573 = vmax.f32 %v571, 0.0
        %v574 = vmax.f32 %v572, 0.0
        %v575 = vadd.f32 %v573, 1e-12
        %v576 = vadd.f32 %v574, 1e-12
        %v577 = vrsqrt.pop %v575
        %v578 = vmul.f32 %v577, %v575
        %v579 = vmul.f32 %v578, %v577
        %v580 = vmul.f32 0.5, %v579
        %v581 = vsub.f32 1.5, %v580
        %v582 = vmul.f32 %v577, %v581
        %vm583 = vweird.f32 %v575
        %vm584 = vweird.f32 %v577
        %vm585 = vmor %vm583, %vm584
        %v586 = vsel %vm585, %v577, %v582
        %v587 = vrsqrt.pop %v576
        %v588 = vmul.f32 %v587, %v576
        %v589 = vmul.f32 %v588, %v587
        %v590 = vmul.f32 0.5, %v589
        %v591 = vsub.f32 1.5, %v590
        %v592 = vmul.f32 %v587, %v591
        %vm593 = vweird.f32 %v576
        %vm594 = vweird.f32 %v587
        %vm595 = vmor %vm593, %vm594
        %v596 = vsel %vm595, %v587, %v592
        %v597 = vperm.slane %v338, 4
        %v598 = vmul.f32 %v597, %v586
        %v599 = vmul.f32 %v597, %v596
        %v600 = vmul.f32 %v551, %v598
        %v601 = vmul.f32 %v553, %v599
        %v602 = vmul.f32 %v559, %v598
        %v603 = vmul.f32 %v560, %v599
        %v604 = vperm.slane %v338, 5
        %v605 = vsub.f32 %v604, %v602
        %v606 = vsub.f32 %v604, %v603
        %v607 = vadd.f32 %v600, %v605
        %v608 = vadd.f32 %v601, %v606
        %v609 = vadd.f32 %v607, %v336
        %v610 = vadd.f32 %v608, %v337
        %611 = vst [vmem:[#allocation10] sm:$0xff] %v609
        %612 = vst [vmem:[#allocation10 + $0x8] sm:$0xff] %v610
        // Predicated region
        $region57: #{tpu_custom_call.1} parent=35 // pred_check
          %p613 = pneg %p157
        $region58: #{tpu_custom_call.1} parent=35 // pred_check_branch
          %615 = sbr.rel (%p613) target = $region60
        $region59: #{tpu_custom_call.1} parent=35 // pred_region
          %s616 = smul.u32 2, %s27
          %618 = vsyncadd [#allocation4], 0
          %s619 = smul.addr %s616, 8
          %s620 = scalar_lea.hbm %s4, %s619
          %s621 = sshll.u32 [#allocation10], 4
          %s622 = int_to_ptr.vmem [resolvable:$true] %s621
          %s623 = sshll.u32 %s620, 4
          %s624 = int_to_ptr.hbm [resolvable:$true] %s623
          %629 = dma.vmem_to_hbm [thread:$0]  %s622, 256, %s624, [#allocation4], 128, 128, 8
        $region60: #{tpu_custom_call.1} parent=35 // pred_fallthru
          _
        // Predicated region
        $region61: #{tpu_custom_call.1} parent=35 // pred_check
          %p630 = pneg %p157
        $region62: #{tpu_custom_call.1} parent=35 // pred_check_branch
          %632 = sbr.rel (%p630) target = $region64
        $region63: #{tpu_custom_call.1} parent=35 // pred_region
          %634 = dma.done [#allocation4], 256
        $region64: #{tpu_custom_call.1} parent=35 // pred_fallthru
          _
      $region36: #{tpu_custom_call.1} parent=5 // pred_fallthru
        _
      %p635 = scmp.le.s32.totalorder 2, %s18
      // Predicated region
      $region65: #{tpu_custom_call.1} parent=5 // pred_check
        %p636 = pneg %p635
      $region66: #{tpu_custom_call.1} parent=5 // pred_check_branch
        %638 = sbr.rel (%p636) target = $region68
      $region67: #{tpu_custom_call.1} parent=5 // pred_region
        %s639 = ssub.s32 %s18, 2
      $region68: #{tpu_custom_call.1} parent=5 // pred_fallthru
        _
    $region6: #{tpu_custom_call.1} parent=1 // loop_footer
      %s22 = sadd.s32 1, %s18
    $region7: #{tpu_custom_call.1} parent=1 // loop_footer_branch
      %17 = sbr.rel target = $region3
    $region8: #{tpu_custom_call.1} parent=1 // loop_exit
      _
    %640 = vsyncpa [#allocation3], 1
    %s641 = scalar_lea.sflag [#allocation3], 1
    %642 = vsyncpa %s641, 1
    %643 = vsyncpa [#allocation6], 1
    %s644 = scalar_lea.sflag [#allocation6], 1
    %645 = vsyncpa %s644, 1
    %646 = vsyncpa [#allocation9], 1
    %s647 = scalar_lea.sflag [#allocation9], 1
    %648 = vsyncpa %s647, 1
    %649 = vsyncpa [#allocation4], 1
    %s650 = scalar_lea.sflag [#allocation4], 1
    %651 = vsyncpa %s650, 1

</llo_original>
